<compile_context>
chip_gen: v7x
topology: tpu7x:2x2x1
jax: 0.10.0
libtpu: 0.0.40
codegen_flags: <defaults>
</compile_context>

<pallas_src>
import functools
import math

import jax
import jax.numpy as jnp
from jax.experimental import pallas as pl
from jax.experimental.pallas import tpu as pltpu


# VMEM budgets (bytes).
_FUSED_VMEM_BUDGET = 40 * 1024 * 1024   # 2x(in) + 2x(out) double-buffered blocks
_PASS1_BLOCK_BUDGET = 8 * 1024 * 1024   # pass 1 pipelines only the x input (2 bufs)
_PASS2_BLOCK_BUDGET = 4 * 1024 * 1024   # pass 2 pipelines in + out (4 bufs)
_VMEM_LIMIT_BYTES = 48 * 1024 * 1024    # scoped VMEM limit for all pallas_calls


def _pick_hw_tile(hw, c, itemsize, budget_bytes):
    """Lane-dense spatial tile: full `hw` if a (C, hw) slab fits the budget,
    otherwise the largest multiple of 128 lanes whose (C, tile) slab fits."""
    if c * hw * itemsize <= budget_bytes:
        return hw
    lanes = (budget_bytes // (c * itemsize)) // 128 * 128
    return max(128, int(lanes))


# ---------------------------------------------------------------------------
# Fused fast path: pool + excite MLP + sigmoid + scale, one HBM read of x.
# ---------------------------------------------------------------------------
def _se_fused_kernel(x_ref, w1_ref, b1_ref, w2_ref, b2_ref, o_ref, *, inv_hw):
    x = x_ref[0]                                                     # (C, HW)
    s = jnp.sum(x.astype(jnp.float32), axis=-1, keepdims=True)       # (C, 1)
    mean = s * inv_hw
    h = jnp.dot(w1_ref[...], mean,
                preferred_element_type=jnp.float32) + b1_ref[...]    # (R, 1)
    h = jnp.maximum(h, 0.0)                                          # ReLU
    g = jnp.dot(w2_ref[...], h,
                preferred_element_type=jnp.float32) + b2_ref[...]    # (C, 1)
    gate = 1.0 / (1.0 + jnp.exp(-g))                                 # sigmoid
    # Multiply in x.dtype (bf16 stays bf16 on v6e/v7x); broadcast along lanes.
    o_ref[0] = (x * gate.astype(x.dtype)).astype(o_ref.dtype)


# ---------------------------------------------------------------------------
# Tiled fallback, pass 1: streaming per-channel spatial sums.
# ---------------------------------------------------------------------------
def _se_pool_kernel(x_ref, sum_ref, acc_ref, *, hw, hw_tile, mask_tail):
    t = pl.program_id(1)

    @pl.when(t == 0)
    def _init():
        acc_ref[...] = jnp.zeros_like(acc_ref)

    x = x_ref[0].astype(jnp.float32)                                 # (C, tile)
    if mask_tail:  # static: only when hw % hw_tile != 0 (lane tail is OOB garbage)
        lane = jax.lax.broadcasted_iota(jnp.int32, x.shape, dimension=1)
        x = jnp.where(t * hw_tile + lane < hw, x, 0.0)
    acc_ref[...] += jnp.sum(x, axis=-1, keepdims=True)               # (C, 1)

    @pl.when(t == pl.num_programs(1) - 1)
    def _finalize():
        sum_ref[0] = acc_ref[...]


# ---------------------------------------------------------------------------
# Tiled fallback, pass 2: channel-wise rescale (gate pre-cast to x.dtype).
# ---------------------------------------------------------------------------
def _se_scale_kernel(x_ref, gate_ref, o_ref):
    o_ref[0] = (x_ref[0] * gate_ref[0]).astype(o_ref.dtype)


def _se_forward(x, w_reduce, b_reduce, w_expand, b_expand, *,
                use_fused=None, block_budget=None):
    """SqueezeExcite forward, mirrors the PyTorch module.

    x:        (N, C, H, W)
    w_reduce: (R, C)   1x1 conv_reduce weight (kernel dims squeezed)
    b_reduce: (R,)
    w_expand: (C, R)   1x1 conv_expand weight
    b_expand: (C,)
    """
    n, c, h, w = x.shape
    hw = h * w
    r = w_reduce.shape[0]
    itemsize = x.dtype.itemsize

    x3 = x.reshape(n, c, hw)                       # free reshape (contiguous)

    w1 = w_reduce.astype(jnp.float32).reshape(r, c)
    b1 = b_reduce.astype(jnp.float32).reshape(r, 1)
    w2 = w_expand.astype(jnp.float32).reshape(c, r)
    b2 = b_expand.astype(jnp.float32).reshape(c, 1)

    if use_fused is None:
        # in + out blocks, double buffered, plus the (tiny) resident weights.
        fused_bytes = 4 * c * hw * itemsize + 8 * c * r * 4 + 8 * (c + r) * 4
        use_fused = fused_bytes <= _FUSED_VMEM_BUDGET

    compiler_common = dict(vmem_limit_bytes=_VMEM_LIMIT_BYTES)

    if use_fused:
        out3 = pl.pallas_call(
            functools.partial(_se_fused_kernel, inv_hw=1.0 / float(hw)),
            out_shape=jax.ShapeDtypeStruct((n, c, hw), x.dtype),
            grid_spec=pltpu.PrefetchScalarGridSpec(
                num_scalar_prefetch=0,
                grid=(n,),
                in_specs=[
                    pl.BlockSpec((1, c, hw), lambda i: (i, 0, 0)),
                    pl.BlockSpec((r, c), lambda i: (0, 0)),
                    pl.BlockSpec((r, 1), lambda i: (0, 0)),
                    pl.BlockSpec((c, r), lambda i: (0, 0)),
                    pl.BlockSpec((c, 1), lambda i: (0, 0)),
                ],
                out_specs=pl.BlockSpec((1, c, hw), lambda i: (i, 0, 0)),
            ),
            compiler_params=pltpu.CompilerParams(
                dimension_semantics=("parallel",), **compiler_common),
        )(x3, w1, b1, w2, b2)
        return out3.reshape(n, c, h, w)

    # ---- tiled two-pass fallback -------------------------------------------
    budget1 = _PASS1_BLOCK_BUDGET if block_budget is None else block_budget
    budget2 = _PASS2_BLOCK_BUDGET if block_budget is None else block_budget
    tile1 = _pick_hw_tile(hw, c, itemsize, budget1)
    tile2 = _pick_hw_tile(hw, c, itemsize, budget2)
    nt1 = pl.cdiv(hw, tile1)
    nt2 = pl.cdiv(hw, tile2)

    # pass 1: per-channel spatial sums -> (N, C, 1) f32
    sums = pl.pallas_call(
        functools.partial(_se_pool_kernel, hw=hw, hw_tile=tile1,
                          mask_tail=(hw % tile1 != 0)),
        out_shape=jax.ShapeDtypeStruct((n, c, 1), jnp.float32),
        grid_spec=pltpu.PrefetchScalarGridSpec(
            num_scalar_prefetch=0,
            grid=(n, nt1),
            in_specs=[pl.BlockSpec((1, c, tile1), lambda i, t: (i, 0, t))],
            out_specs=pl.BlockSpec((1, c, 1), lambda i, t: (i, 0, 0)),
            scratch_shapes=[pltpu.VMEM((c, 1), jnp.float32)],
        ),
        compiler_params=pltpu.CompilerParams(
            dimension_semantics=("parallel", "arbitrary"), **compiler_common),
    )(x3)

    # Tiny excite MLP, batched over N, hoisted out of the streaming kernel
    # (per review: removes lane-width-1 matvecs from the reduction loop).
    mean = sums[:, :, 0] * (1.0 / float(hw))                      # (N, C) f32
    hid = jnp.maximum(mean @ w1.T + b1[:, 0], 0.0)                # (N, R)
    gate = jax.nn.sigmoid(hid @ w2.T + b2[:, 0])                  # (N, C) f32
    gate = gate.astype(x.dtype).reshape(n, c, 1)

    # pass 2: x * gate (broadcast over H*W); tail OOB stores are clipped.
    out3 = pl.pallas_call(
        _se_scale_kernel,
        out_shape=jax.ShapeDtypeStruct((n, c, hw), x.dtype),
        grid_spec=pltpu.PrefetchScalarGridSpec(
            num_scalar_prefetch=0,
            grid=(n, nt2),
            in_specs=[
                pl.BlockSpec((1, c, tile2), lambda i, t: (i, 0, t)),
                pl.BlockSpec((1, c, 1), lambda i, t: (i, 0, 0)),
            ],
            out_specs=pl.BlockSpec((1, c, tile2), lambda i, t: (i, 0, t)),
        ),
        compiler_params=pltpu.CompilerParams(
            dimension_semantics=("parallel", "parallel"), **compiler_common),
    )(x3, gate)

    return out3.reshape(n, c, h, w)


_se_forward_jit = jax.jit(_se_forward, static_argnames=("use_fused", "block_budget"))


class SqueezeExcite:
    """JAX/Pallas mirror of the PyTorch SqueezeExcite module (NCHW)."""

    def __init__(self, c1, se_ratio=0.25, *, key=None):
        reduced = max(1, int(c1 * se_ratio))
        if key is None:
            key = jax.random.PRNGKey(0)
        k1, k2, k3, k4 = jax.random.split(key, 4)
        bound1 = 1.0 / math.sqrt(c1)
        bound2 = 1.0 / math.sqrt(reduced)
        self.w_reduce = jax.random.uniform(k1, (reduced, c1), jnp.float32, -bound1, bound1)
        self.b_reduce = jax.random.uniform(k2, (reduced,), jnp.float32, -bound1, bound1)
        self.w_expand = jax.random.uniform(k3, (c1, reduced), jnp.float32, -bound2, bound2)
        self.b_expand = jax.random.uniform(k4, (c1,), jnp.float32, -bound2, bound2)

    def __call__(self, x, **kw):
        return _se_forward_jit(x, self.w_reduce, self.b_reduce,
                               self.w_expand, self.b_expand, **kw)


def _reference(x, mod):
    mean = x.mean(axis=(2, 3))                                        # (N, C)
    h = jnp.maximum(mean @ mod.w_reduce.T + mod.b_reduce, 0.0)        # (N, R)
    g = jax.nn.sigmoid(h @ mod.w_expand.T + mod.b_expand)             # (N, C)
    return x * g[:, :, None, None]


if __name__ == "__main__":
    key = jax.random.PRNGKey(0)
    kx1, kx2, kmod = jax.random.split(key, 3)

    N, C = 2, 32                         # reduced_chs = int(32 * 0.25) = 8
    mod = SqueezeExcite(C, se_ratio=0.25, key=kmod)

    # --- test 1: fused single-pass path (HW = 256, fits VMEM) ---------------
    x1 = jax.random.normal(kx1, (N, C, 16, 16), dtype=jnp.float32)
    out1 = jax.block_until_ready(mod(x1))
    ref1 = _reference(x1, mod)
    assert out1.shape == x1.shape and out1.dtype == x1.dtype
    err1 = float(jnp.max(jnp.abs(out1 - ref1)))
    assert jnp.allclose(out1, ref1, atol=1e-5, rtol=1e-5), err1

    # --- test 2: tiled two-pass path with HW=196 (not a multiple of 128) ----
    # Force the fallback and a tiny block budget so multi-tile accumulation,
    # lane-tail masking, and clipped tail stores are all exercised.
    x2 = jax.random.normal(kx2, (N, C, 14, 14), dtype=jnp.float32)
    out2 = jax.block_until_ready(mod(x2, use_fused=False, block_budget=16 * 1024))
    ref2 = _reference(x2, mod)
    assert out2.shape == x2.shape and out2.dtype == x2.dtype
    err2 = float(jnp.max(jnp.abs(out2 - ref2)))
    assert jnp.allclose(out2, ref2, atol=1e-5, rtol=1e-5), err2

    print("KERNEL_OK")
</pallas_src>

<mosaic_0001>
module attributes {stable_mosaic.version = 11 : i64} {
  func.func @_se_fused_kernel(%arg0: i32, %arg1: memref<1x32x256xf32, #tpu.memory_space<vmem>>, %arg2: memref<8x32xf32, #tpu.memory_space<vmem>>, %arg3: memref<8x1xf32, #tpu.memory_space<vmem>>, %arg4: memref<32x8xf32, #tpu.memory_space<vmem>>, %arg5: memref<32x1xf32, #tpu.memory_space<vmem>>, %arg6: memref<1x32x256xf32, #tpu.memory_space<vmem>>) attributes {dimension_semantics = [#tpu.dimension_semantics<parallel>], iteration_bounds = array<i64: 2>, scalar_prefetch = 0 : i64, scratch_operands = 0 : i64, tpu.core_type = #tpu.core_type<tc>, window_params = [{transform_indices = @transform_0, window_bounds = array<i64: 1, 32, 256>}, {pipeline_mode = #tpu.pipeline_mode<synchronous>, transform_indices = @transform_1, window_bounds = array<i64: 8, 32>}, {pipeline_mode = #tpu.pipeline_mode<synchronous>, transform_indices = @transform_2, window_bounds = array<i64: 8, 1>}, {pipeline_mode = #tpu.pipeline_mode<synchronous>, transform_indices = @transform_3, window_bounds = array<i64: 32, 8>}, {pipeline_mode = #tpu.pipeline_mode<synchronous>, transform_indices = @transform_4, window_bounds = array<i64: 32, 1>}, {transform_indices = @transform_5, window_bounds = array<i64: 1, 32, 256>}]} {
    %c0 = arith.constant 0 : index
    %c0_0 = arith.constant 0 : index
    %c0_1 = arith.constant 0 : index
    %0 = vector.load %arg1[%c0, %c0_0, %c0_1] : memref<1x32x256xf32, #tpu.memory_space<vmem>>, vector<1x32x256xf32>
    %1 = vector.shape_cast %0 : vector<1x32x256xf32> to vector<32x256xf32>
    %cst = arith.constant dense<0.000000e+00> : vector<32xf32>
    %2 = vector.multi_reduction <add>, %1, %cst [1] : vector<32x256xf32> to vector<32xf32>
    %3 = vector.shape_cast %2 : vector<32xf32> to vector<32x1xf32>
    %cst_2 = arith.constant 3.906250e-03 : f32
    %4 = vector.broadcast %cst_2 : f32 to vector<32x1xf32>
    %5 = arith.mulf %3, %4 : vector<32x1xf32>
    %c0_3 = arith.constant 0 : index
    %c0_4 = arith.constant 0 : index
    %6 = vector.load %arg2[%c0_3, %c0_4] : memref<8x32xf32, #tpu.memory_space<vmem>>, vector<8x32xf32>
    %cst_5 = arith.constant dense<0.000000e+00> : vector<8x1xf32>
    %7 = tpu.matmul %6, %5, %cst_5 {dimension_numbers = #tpu.dot_dimension_numbers<[1], [0], [0], [1], [0, 0, 1, 1], [], []>} : vector<8x32xf32>, vector<32x1xf32>, vector<8x1xf32> -> vector<8x1xf32>
    %c0_6 = arith.constant 0 : index
    %c0_7 = arith.constant 0 : index
    %8 = vector.load %arg3[%c0_6, %c0_7] : memref<8x1xf32, #tpu.memory_space<vmem>>, vector<8x1xf32>
    %9 = arith.addf %7, %8 : vector<8x1xf32>
    %cst_8 = arith.constant 0.000000e+00 : f32
    %10 = vector.broadcast %cst_8 : f32 to vector<8x1xf32>
    %11 = arith.maximumf %9, %10 : vector<8x1xf32>
    %c0_9 = arith.constant 0 : index
    %c0_10 = arith.constant 0 : index
    %12 = vector.load %arg4[%c0_9, %c0_10] : memref<32x8xf32, #tpu.memory_space<vmem>>, vector<32x8xf32>
    %cst_11 = arith.constant dense<0.000000e+00> : vector<32x1xf32>
    %13 = tpu.matmul %12, %11, %cst_11 {dimension_numbers = #tpu.dot_dimension_numbers<[1], [0], [0], [1], [0, 0, 1, 1], [], []>} : vector<32x8xf32>, vector<8x1xf32>, vector<32x1xf32> -> vector<32x1xf32>
    %c0_12 = arith.constant 0 : index
    %c0_13 = arith.constant 0 : index
    %14 = vector.load %arg5[%c0_12, %c0_13] : memref<32x1xf32, #tpu.memory_space<vmem>>, vector<32x1xf32>
    %15 = arith.addf %13, %14 : vector<32x1xf32>
    %cst_14 = arith.constant 0.000000e+00 : f32
    %16 = vector.broadcast %cst_14 : f32 to vector<32x1xf32>
    %17 = arith.subf %16, %15 : vector<32x1xf32>
    %18 = math.exp %17 : vector<32x1xf32>
    %cst_15 = arith.constant 1.000000e+00 : f32
    %19 = vector.broadcast %cst_15 : f32 to vector<32x1xf32>
    %20 = arith.addf %19, %18 : vector<32x1xf32>
    %cst_16 = arith.constant 1.000000e+00 : f32
    %21 = vector.broadcast %cst_16 : f32 to vector<32x1xf32>
    %22 = arith.divf %21, %20 : vector<32x1xf32>
    %23 = vector.broadcast %22 : vector<32x1xf32> to vector<32x256xf32>
    %24 = arith.mulf %1, %23 : vector<32x256xf32>
    %c0_17 = arith.constant 0 : index
    %c0_18 = arith.constant 0 : index
    %c0_19 = arith.constant 0 : index
    %25 = vector.load %arg6[%c0_17, %c0_18, %c0_19] : memref<1x32x256xf32, #tpu.memory_space<vmem>>, vector<1x32x256xf32>
    %26 = vector.shape_cast %25 : vector<1x32x256xf32> to vector<32x256xf32>
    %27 = vector.shape_cast %24 : vector<32x256xf32> to vector<1x32x256xf32>
    tpu.vector_store %arg6[%c0_17, %c0_18, %c0_19], %27 {strides = array<i32>} : memref<1x32x256xf32, #tpu.memory_space<vmem>>, vector<1x32x256xf32>,
    return
  }
  func.func @transform_0(%arg0: i32) -> (i32, i32, i32) {
    %c0_i32 = arith.constant 0 : i32
    %c0_i32_0 = arith.constant 0 : i32
    %c0_i32_1 = arith.constant 0 : i32
    return %arg0, %c0_i32, %c0_i32_0 : i32, i32, i32
  }
  func.func @transform_1(%arg0: i32) -> (i32, i32) {
    %c0_i32 = arith.constant 0 : i32
    %c0_i32_0 = arith.constant 0 : i32
    %c0_i32_1 = arith.constant 0 : i32
    return %c0_i32, %c0_i32_0 : i32, i32
  }
  func.func @transform_2(%arg0: i32) -> (i32, i32) {
    %c0_i32 = arith.constant 0 : i32
    %c0_i32_0 = arith.constant 0 : i32
    %c0_i32_1 = arith.constant 0 : i32
    return %c0_i32, %c0_i32_0 : i32, i32
  }
  func.func @transform_3(%arg0: i32) -> (i32, i32) {
    %c0_i32 = arith.constant 0 : i32
    %c0_i32_0 = arith.constant 0 : i32
    %c0_i32_1 = arith.constant 0 : i32
    return %c0_i32, %c0_i32_0 : i32, i32
  }
  func.func @transform_4(%arg0: i32) -> (i32, i32) {
    %c0_i32 = arith.constant 0 : i32
    %c0_i32_0 = arith.constant 0 : i32
    %c0_i32_1 = arith.constant 0 : i32
    return %c0_i32, %c0_i32_0 : i32, i32
  }
  func.func @transform_5(%arg0: i32) -> (i32, i32, i32) {
    %c0_i32 = arith.constant 0 : i32
    %c0_i32_0 = arith.constant 0 : i32
    %c0_i32_1 = arith.constant 0 : i32
    return %arg0, %c0_i32, %c0_i32_0 : i32, i32, i32
  }
}

</mosaic_0001>

<llo_original>
// kernel: _se_forward.1
$region0: #{_se_forward.1}
  #allocation0 [shape = 'u32[]', space=smem, size = 0x4, offset = 0x4, fixed_abs, tag = 'smem constant byte address 0x4 - core index']
  #allocation1 [shape = 'u32[144,128]{1,0:T(1,128)}', space=vmem, size = 0x12000, scoped, tag = 'internal scratch']
  %s0 = inlined_call_operand.vmem [shape: f32[2,32,256], index: 0, kind: input, shape index: {}]
  %s1 = inlined_call_operand.vmem [shape: f32[8,32], index: 1, kind: input, shape index: {}]
  %s2 = inlined_call_operand.vmem [shape: f32[8,1], index: 2, kind: input, shape index: {}]
  %s3 = inlined_call_operand.vmem [shape: f32[32,8], index: 3, kind: input, shape index: {}]
  %s4 = inlined_call_operand.vmem [shape: f32[32,1], index: 4, kind: input, shape index: {}]
  %s5 = inlined_call_operand.vmem [shape: f32[2,32,256], index: 5, kind: output, shape index: {}]
  %s6 = sld [smem:[#allocation0]]
  $region53: #{_se_forward.1} parent=0
    _
  %s8 = ssub.s32 1, %s6
  %s9 = scalar_select 0, %s8, %s6
  loop: start=0, step=1, limit=4
  $region2: #{_se_forward.1} parent=0 // loop_pre_header
    _
  $region3: #{_se_forward.1} parent=0 // loop_header
    %s11 = sphi 0, %s15
    %p12 = scmp.ge.s32.totalorder %s11, 4
    %s21 = sphi 0, %s23
    %s24 = sphi 0, %s21
    %s25 = sphi 0, %s24
    %s41 = sphi 0, %s25
    %s45 = sphi 0, %s45
    %s47 = sphi 0, %s45
    %s48 = sphi 0, %s47
    %s62 = sphi 0, %s48
    %s66 = sphi 0, %s66
    %s68 = sphi 0, %s66
    %s69 = sphi 0, %s68
    %s83 = sphi 0, %s69
    %s87 = sphi 0, %s87
    %s89 = sphi 0, %s87
    %s90 = sphi 0, %s89
    %s104 = sphi 0, %s90
    %s108 = sphi 0, %s108
    %s110 = sphi 0, %s108
    %s111 = sphi 0, %s110
    %s125 = sphi 0, %s111
    %s131 = sphi 0, %s133
    %s134 = sphi 0, %s131
    %s135 = sphi 0, %s134
    %s151 = sphi 0, %s135
  $region4: #{_se_forward.1} parent=0 // loop_header_branch
    %14 = sbr.rel (%p12) target = $region8
  $region5: #{_se_forward.1} parent=0 // loop_body
    %s16 = ssub.s32 %s11, 1
    %s17 = ssub.s32 %s11, 2
    %s18 = sadd.s32 %s11, 1
    %s19 = ssub.s32 %s11, %s18
    %p20 = scmp.eq.s32.totalorder %s19, 0
    %s22 = sadd.s32 %s21, 1
    %s23 = scalar_select %p20, %s21, %s22
    %p26 = pneg %p20
    %p27 = scmp.eq.s32.totalorder %s11, 1
    %p28 = por %p26, %p27
    %p29 = scmp.ne.s32.totalorder %s21, %s24
    %p30 = scmp.eq.s32.totalorder %s11, 0
    %p31 = por %p29, %p30
    %p32 = scmp.ne.s32.totalorder %s21, %s24
    %p33 = scmp.eq.s32.totalorder %s16, 1
    %p34 = por %p32, %p33
    %p35 = scmp.ne.s32.totalorder %s24, %s25
    %p36 = scmp.eq.s32.totalorder %s16, 0
    %p37 = por %p35, %p36
    %p38 = scmp.ne.s32.totalorder %s24, %s25
    %p39 = scmp.eq.s32.totalorder %s17, 1
    %p40 = por %p38, %p39
    %p42 = scmp.ne.s32.totalorder %s25, %s41
    %p43 = scmp.eq.s32.totalorder %s17, 0
    %p44 = por %p42, %p43
    %s46 = sadd.s32 %s45, 1
    %p49 = scmp.eq.s32.totalorder %s11, 1
    %p50 = scmp.ne.s32.totalorder %s45, %s47
    %p51 = scmp.eq.s32.totalorder %s11, 0
    %p52 = por %p50, %p51
    %p53 = scmp.ne.s32.totalorder %s45, %s47
    %p54 = scmp.eq.s32.totalorder %s16, 1
    %p55 = por %p53, %p54
    %p56 = scmp.ne.s32.totalorder %s47, %s48
    %p57 = scmp.eq.s32.totalorder %s16, 0
    %p58 = por %p56, %p57
    %p59 = scmp.ne.s32.totalorder %s47, %s48
    %p60 = scmp.eq.s32.totalorder %s17, 1
    %p61 = por %p59, %p60
    %p63 = scmp.ne.s32.totalorder %s48, %s62
    %p64 = scmp.eq.s32.totalorder %s17, 0
    %p65 = por %p63, %p64
    %s67 = sadd.s32 %s66, 1
    %p70 = scmp.eq.s32.totalorder %s11, 1
    %p71 = scmp.ne.s32.totalorder %s66, %s68
    %p72 = scmp.eq.s32.totalorder %s11, 0
    %p73 = por %p71, %p72
    %p74 = scmp.ne.s32.totalorder %s66, %s68
    %p75 = scmp.eq.s32.totalorder %s16, 1
    %p76 = por %p74, %p75
    %p77 = scmp.ne.s32.totalorder %s68, %s69
    %p78 = scmp.eq.s32.totalorder %s16, 0
    %p79 = por %p77, %p78
    %p80 = scmp.ne.s32.totalorder %s68, %s69
    %p81 = scmp.eq.s32.totalorder %s17, 1
    %p82 = por %p80, %p81
    %p84 = scmp.ne.s32.totalorder %s69, %s83
    %p85 = scmp.eq.s32.totalorder %s17, 0
    %p86 = por %p84, %p85
    %s88 = sadd.s32 %s87, 1
    %p91 = scmp.eq.s32.totalorder %s11, 1
    %p92 = scmp.ne.s32.totalorder %s87, %s89
    %p93 = scmp.eq.s32.totalorder %s11, 0
    %p94 = por %p92, %p93
    %p95 = scmp.ne.s32.totalorder %s87, %s89
    %p96 = scmp.eq.s32.totalorder %s16, 1
    %p97 = por %p95, %p96
    %p98 = scmp.ne.s32.totalorder %s89, %s90
    %p99 = scmp.eq.s32.totalorder %s16, 0
    %p100 = por %p98, %p99
    %p101 = scmp.ne.s32.totalorder %s89, %s90
    %p102 = scmp.eq.s32.totalorder %s17, 1
    %p103 = por %p101, %p102
    %p105 = scmp.ne.s32.totalorder %s90, %s104
    %p106 = scmp.eq.s32.totalorder %s17, 0
    %p107 = por %p105, %p106
    %s109 = sadd.s32 %s108, 1
    %p112 = scmp.eq.s32.totalorder %s11, 1
    %p113 = scmp.ne.s32.totalorder %s108, %s110
    %p114 = scmp.eq.s32.totalorder %s11, 0
    %p115 = por %p113, %p114
    %p116 = scmp.ne.s32.totalorder %s108, %s110
    %p117 = scmp.eq.s32.totalorder %s16, 1
    %p118 = por %p116, %p117
    %p119 = scmp.ne.s32.totalorder %s110, %s111
    %p120 = scmp.eq.s32.totalorder %s16, 0
    %p121 = por %p119, %p120
    %p122 = scmp.ne.s32.totalorder %s110, %s111
    %p123 = scmp.eq.s32.totalorder %s17, 1
    %p124 = por %p122, %p123
    %p126 = scmp.ne.s32.totalorder %s111, %s125
    %p127 = scmp.eq.s32.totalorder %s17, 0
    %p128 = por %p126, %p127
    %s129 = ssub.s32 %s11, %s18
    %p130 = scmp.eq.s32.totalorder %s129, 0
    %s132 = sadd.s32 %s131, 1
    %s133 = scalar_select %p130, %s131, %s132
    %p136 = pneg %p130
    %p137 = scmp.eq.s32.totalorder %s11, 1
    %p138 = por %p136, %p137
    %p139 = scmp.ne.s32.totalorder %s131, %s134
    %p140 = scmp.eq.s32.totalorder %s11, 0
    %p141 = por %p139, %p140
    %p142 = scmp.ne.s32.totalorder %s131, %s134
    %p143 = scmp.eq.s32.totalorder %s16, 1
    %p144 = por %p142, %p143
    %p145 = scmp.ne.s32.totalorder %s134, %s135
    %p146 = scmp.eq.s32.totalorder %s16, 0
    %p147 = por %p145, %p146
    %p148 = scmp.ne.s32.totalorder %s134, %s135
    %p149 = scmp.eq.s32.totalorder %s17, 1
    %p150 = por %p148, %p149
    %p152 = scmp.ne.s32.totalorder %s135, %s151
    %p153 = scmp.eq.s32.totalorder %s17, 0
    %p154 = por %p152, %p153
    %p155 = scmp.le.s32.totalorder 1, %s11
    %p156 = scmp.lt.s32.totalorder %s11, 3
    %p157 = pnand %p155, %p156
    %p158 = pneg %p157
    // Predicated region
    $region9: #{_se_forward.1} parent=5 // pred_check
      _
    $region10: #{_se_forward.1} parent=5 // pred_check_branch
      %160 = sbr.rel (%p157) target = $region12
    $region11: #{_se_forward.1} parent=5 // pred_region
      %s161 = ssub.s32 %s11, 1
      // Predicated region
      $region13: #{_se_forward.1} parent=11 // pred_check
        %p162 = pneg %p58
      $region14: #{_se_forward.1} parent=11 // pred_check_branch
        %164 = sbr.rel (%p162) target = $region16
      $region15: #{_se_forward.1} parent=11 // pred_region
        _
      $region16: #{_se_forward.1} parent=11 // pred_fallthru
        _
      // Predicated region
      $region17: #{_se_forward.1} parent=11 // pred_check
        %p165 = pneg %p79
      $region18: #{_se_forward.1} parent=11 // pred_check_branch
        %167 = sbr.rel (%p165) target = $region20
      $region19: #{_se_forward.1} parent=11 // pred_region
        _
      $region20: #{_se_forward.1} parent=11 // pred_fallthru
        _
      // Predicated region
      $region21: #{_se_forward.1} parent=11 // pred_check
        %p168 = pneg %p100
      $region22: #{_se_forward.1} parent=11 // pred_check_branch
        %170 = sbr.rel (%p168) target = $region24
      $region23: #{_se_forward.1} parent=11 // pred_region
        _
      $region24: #{_se_forward.1} parent=11 // pred_fallthru
        _
      // Predicated region
      $region25: #{_se_forward.1} parent=11 // pred_check
        %p171 = pneg %p121
      $region26: #{_se_forward.1} parent=11 // pred_check_branch
        %173 = sbr.rel (%p171) target = $region28
      $region27: #{_se_forward.1} parent=11 // pred_region
        _
      $region28: #{_se_forward.1} parent=11 // pred_fallthru
        _
    $region12: #{_se_forward.1} parent=5 // pred_fallthru
      _
    %p174 = scmp.lt.s32.totalorder %s11, 2
    // Predicated region
    $region29: #{_se_forward.1} parent=5 // pred_check
      %p175 = pneg %p174
    $region30: #{_se_forward.1} parent=5 // pred_check_branch
      %177 = sbr.rel (%p175) target = $region32
    $region31: #{_se_forward.1} parent=5 // pred_region
      // Predicated region
      $region33: #{_se_forward.1} parent=31 // pred_check
        %p178 = pneg %p31
      $region34: #{_se_forward.1} parent=31 // pred_check_branch
        %180 = sbr.rel (%p178) target = $region36
      $region35: #{_se_forward.1} parent=31 // pred_region
        %p181 = scmp.lt.s32.totalorder %s11, 1
        %s182 = scalar_select %p181, %s11, 1
        %s183 = smul.addr %s182, 8
        %s184 = smul.addr %s183, 8
        %s185 = scalar_lea.vmem %s0, %s184
      $region36: #{_se_forward.1} parent=31 // pred_fallthru
        _
    $region32: #{_se_forward.1} parent=5 // pred_fallthru
      _
    %p186 = scmp.le.s32.totalorder 1, %s11
    %p187 = scmp.lt.s32.totalorder %s11, 3
    %p188 = pnand %p186, %p187
    %p189 = pneg %p188
    // Predicated region
    $region37: #{_se_forward.1} parent=5 // pred_check
      _
    $region38: #{_se_forward.1} parent=5 // pred_check_branch
      %191 = sbr.rel (%p188) target = $region40
    $region39: #{_se_forward.1} parent=5 // pred_region
      %s192 = ssub.s32 %s11, 1
      %p193 = scmp.lt.s32.totalorder %s16, 1
      %s194 = scalar_select %p193, %s16, 1
      %s195 = smul.addr %s194, 8
      %s196 = smul.addr %s195, 8
      %s197 = scalar_lea.vmem %s0, %s196
      %p198 = pneg %p37
      %p199 = pneg %p34
      %p200 = pneg %p58
      %p201 = pneg %p55
      %p202 = pneg %p79
      %p203 = pneg %p76
      %p204 = pneg %p100
      %p205 = pneg %p97
      %p206 = pneg %p121
      %p207 = pneg %p118
      %p208 = pneg %p147
      %p209 = pneg %p144
      %p210 = scmp.lt.s32.totalorder %s16, 1
      %s211 = scalar_select %p210, %s16, 1
      %s212 = smul.addr %s211, 8
      %s213 = smul.addr %s212, 8
      %s214 = scalar_lea.vmem %s5, %s213
      %p215 = scmp.lt.s32.totalorder %s16, 1
      %s216 = scalar_select %p215, %s16, 1
      %s217 = smul.addr %s216, 8
      %s218 = smul.addr %s217, 8
      %s219 = scalar_lea.vmem %s0, %s218
      %p220 = scmp.lt.s32.totalorder %s16, 1
      %s221 = scalar_select %p220, %s16, 1
      %s222 = smul.addr %s221, 8
      %s223 = smul.addr %s222, 8
      %s224 = scalar_lea.vmem %s5, %s223
      %v225 = vld [vmem:[%s219] sm:$0xff]
      %v226 = vld [vmem:[%s219 + $0x8] sm:$0xff]
      %v227 = vld [vmem:[%s219 + $0x10] sm:$0xff]
      %v228 = vld [vmem:[%s219 + $0x18] sm:$0xff]
      %v229 = vld [vmem:[%s219 + $0x20] sm:$0xff]
      %v230 = vld [vmem:[%s219 + $0x28] sm:$0xff]
      %v231 = vld [vmem:[%s219 + $0x30] sm:$0xff]
      %v232 = vld [vmem:[%s219 + $0x38] sm:$0xff]
      %v233 = vadd.f32 %v225, %v226
      %234 = vadd.xlane.f32.xlu0 %v233
      %v235 = vpop.xlane.xlu0 %234
      %v236 = vadd.f32 %v227, %v228
      %237 = vadd.xlane.f32.xlu0 %v236
      %v238 = vpop.xlane.xlu0 %237
      %v239 = vadd.f32 %v229, %v230
      %240 = vadd.xlane.f32.xlu0 %v239
      %v241 = vpop.xlane.xlu0 %240
      %v242 = vadd.f32 %v231, %v232
      %243 = vadd.xlane.f32.xlu0 %v242
      %v244 = vpop.xlane.xlu0 %243
      %v245 = vmul.f32 %v235, 0.00390625
      %v246 = vmul.f32 %v238, 0.00390625
      %v247 = vmul.f32 %v241, 0.00390625
      %v248 = vmul.f32 %v244, 0.00390625
      %v249 = vld [vmem:[%s1] sm:$0xff]
      %v250 = vld [vmem:[%s2] sm:$0xff]
      %vm251 = vcmask 261120
      %v253 = vsel %vm251, %v249, 0
      %255 = vmatprep.subr.mxu0 0.0
      %256 = vmatpush1.msra.mxu0 %v245
      %257 = vmatprep.subr.mxu0 0.0
      %258 = vmatpush1.msra.mxu0 %v246
      %259 = vmatprep.subr.mxu0 0.0
      %260 = vmatpush1.msra.mxu0 %v247
      %261 = vmatprep.subr.mxu0 0.0
      %262 = vmatpush1.msra.mxu0 %v248
      %263 = vmatprep.subr.mxu0 0.0
      %264 = vmatpush1.msra.mxu0 0.0
      %265 = vmatprep.subr.mxu0 0.0
      %266 = vmatpush1.msra.mxu0 0.0
      %267 = vmatprep.subr.mxu0 0.0
      %268 = vmatpush1.msra.mxu0 0.0
      %269 = vmatprep.subr.mxu0 0.0
      %270 = vmatpush1.msra.mxu0 0.0
      %271 = vmatprep.subr.mxu0 0.0
      %272 = vmatpush1.msra.mxu0 0.0
      %273 = vmatprep.subr.mxu0 0.0
      %274 = vmatpush1.msra.mxu0 0.0
      %275 = vmatprep.subr.mxu0 0.0
      %276 = vmatpush1.msra.mxu0 0.0
      %277 = vmatprep.subr.mxu0 0.0
      %278 = vmatpush1.msra.mxu0 0.0
      %279 = vmatprep.subr.mxu0 0.0
      %280 = vmatpush1.msra.mxu0 0.0
      %281 = vmatprep.subr.mxu0 0.0
      %282 = vmatpush1.msra.mxu0 0.0
      %283 = vmatprep.subr.mxu0 0.0
      %284 = vmatpush1.msra.mxu0 0.0
      %285 = vmatprep.subr.mxu0 0.0
      %286 = vmatpush1.msra.mxu0 0.0
      %287 = vmatprep.subr.mxu0 0.0
      %288 = vmatpush1.msra.mxu0 0.0
      %289 = vmatprep.subr.mxu0 0.0
      %290 = vmatpush1.msra.mxu0 0.0
      %291 = vmatprep.subr.mxu0 0.0
      %292 = vmatpush1.msra.mxu0 0.0
      %293 = vmatprep.subr.mxu0 0.0
      %294 = vmatpush1.msra.mxu0 0.0
      %295 = vmatprep.subr.mxu0 0.0
      %296 = vmatpush1.msra.mxu0 0.0
      %297 = vmatprep.subr.mxu0 0.0
      %298 = vmatpush1.msra.mxu0 0.0
      %299 = vmatprep.subr.mxu0 0.0
      %300 = vmatpush1.msra.mxu0 0.0
      %301 = vmatprep.subr.mxu0 0.0
      %302 = vmatpush1.msra.mxu0 0.0
      %303 = vmatprep.subr.mxu0 0.0
      %304 = vmatpush1.msra.mxu0 0.0
      %305 = vmatprep.subr.mxu0 0.0
      %306 = vmatpush1.msra.mxu0 0.0
      %307 = vmatprep.subr.mxu0 0.0
      %308 = vmatpush1.msra.mxu0 0.0
      %309 = vmatprep.subr.mxu0 0.0
      %310 = vmatpush1.msra.mxu0 0.0
      %311 = vmatprep.subr.mxu0 0.0
      %312 = vmatpush1.msra.mxu0 0.0
      %313 = vmatprep.subr.mxu0 0.0
      %314 = vmatpush1.msra.mxu0 0.0
      %315 = vmatprep.subr.mxu0 0.0
      %316 = vmatpush1.msra.mxu0 0.0
      %317 = vmatprep.subr.mxu0 0.0
      %318 = vmatpush1.msra.mxu0 0.0
      %319 = vmatprep.mubr.f32.mxu0 0.0
      %320 = vmatmul.mubr.f32.gmra.mrb[0].mxu0 %v253
      %v321 = vpop.f32.mrb[0].mxu0
      %v322 = vadd.f32 %v250, %v321
      %v323 = vpop.f32.mrb[0].mxu0
      %324 = vdwg.mxu0
      %v325 = vmax.f32 %v322, 0.0
      %v326 = vld [vmem:[%s3] sm:$0xff]
      %v327 = vld [vmem:[%s3 + $0x8] sm:$0xff]
      %v328 = vld [vmem:[%s3 + $0x10] sm:$0xff]
      %v329 = vld [vmem:[%s3 + $0x18] sm:$0xff]
      %v330 = vld [vmem:[%s4] sm:$0xff]
      %v331 = vld [vmem:[%s4 + $0x8] sm:$0xff]
      %v332 = vld [vmem:[%s4 + $0x10] sm:$0xff]
      %v333 = vld [vmem:[%s4 + $0x18] sm:$0xff]
      %vm334 = vcmask 64512
      %v336 = vsel %vm334, %v326, 0
      %v339 = vsel %vm334, %v327, 0
      %v342 = vsel %vm334, %v328, 0
      %v345 = vsel %vm334, %v329, 0
      %347 = vmatprep.subr.mxu0 0.0
      %348 = vmatpush1.msra.mxu0 %v325
      %349 = vmatprep.subr.mxu0 0.0
      %350 = vmatpush1.msra.mxu0 0.0
      %351 = vmatprep.subr.mxu0 0.0
      %352 = vmatpush1.msra.mxu0 0.0
      %353 = vmatprep.subr.mxu0 0.0
      %354 = vmatpush1.msra.mxu0 0.0
      %355 = vmatprep.subr.mxu0 0.0
      %356 = vmatpush1.msra.mxu0 0.0
      %357 = vmatprep.subr.mxu0 0.0
      %358 = vmatpush1.msra.mxu0 0.0
      %359 = vmatprep.subr.mxu0 0.0
      %360 = vmatpush1.msra.mxu0 0.0
      %361 = vmatprep.subr.mxu0 0.0
      %362 = vmatpush1.msra.mxu0 0.0
      %363 = vmatprep.subr.mxu0 0.0
      %364 = vmatpush1.msra.mxu0 0.0
      %365 = vmatprep.subr.mxu0 0.0
      %366 = vmatpush1.msra.mxu0 0.0
      %367 = vmatprep.subr.mxu0 0.0
      %368 = vmatpush1.msra.mxu0 0.0
      %369 = vmatprep.subr.mxu0 0.0
      %370 = vmatpush1.msra.mxu0 0.0
      %371 = vmatprep.subr.mxu0 0.0
      %372 = vmatpush1.msra.mxu0 0.0
      %373 = vmatprep.subr.mxu0 0.0
      %374 = vmatpush1.msra.mxu0 0.0
      %375 = vmatprep.subr.mxu0 0.0
      %376 = vmatpush1.msra.mxu0 0.0
      %377 = vmatprep.subr.mxu0 0.0
      %378 = vmatpush1.msra.mxu0 0.0
      %379 = vmatprep.subr.mxu0 0.0
      %380 = vmatpush1.msra.mxu0 0.0
      %381 = vmatprep.subr.mxu0 0.0
      %382 = vmatpush1.msra.mxu0 0.0
      %383 = vmatprep.subr.mxu0 0.0
      %384 = vmatpush1.msra.mxu0 0.0
      %385 = vmatprep.subr.mxu0 0.0
      %386 = vmatpush1.msra.mxu0 0.0
      %387 = vmatprep.subr.mxu0 0.0
      %388 = vmatpush1.msra.mxu0 0.0
      %389 = vmatprep.subr.mxu0 0.0
      %390 = vmatpush1.msra.mxu0 0.0
      %391 = vmatprep.subr.mxu0 0.0
      %392 = vmatpush1.msra.mxu0 0.0
      %393 = vmatprep.subr.mxu0 0.0
      %394 = vmatpush1.msra.mxu0 0.0
      %395 = vmatprep.subr.mxu0 0.0
      %396 = vmatpush1.msra.mxu0 0.0
      %397 = vmatprep.subr.mxu0 0.0
      %398 = vmatpush1.msra.mxu0 0.0
      %399 = vmatprep.subr.mxu0 0.0
      %400 = vmatpush1.msra.mxu0 0.0
      %401 = vmatprep.subr.mxu0 0.0
      %402 = vmatpush1.msra.mxu0 0.0
      %403 = vmatprep.subr.mxu0 0.0
      %404 = vmatpush1.msra.mxu0 0.0
      %405 = vmatprep.subr.mxu0 0.0
      %406 = vmatpush1.msra.mxu0 0.0
      %407 = vmatprep.subr.mxu0 0.0
      %408 = vmatpush1.msra.mxu0 0.0
      %409 = vmatprep.subr.mxu0 0.0
      %410 = vmatpush1.msra.mxu0 0.0
      %411 = vmatprep.mubr.f32.mxu0 0.0
      %412 = vmatmul.mubr.f32.gmra.mrb[0].mxu0 %v336
      %v413 = vpop.f32.mrb[0].mxu0
      %v414 = vadd.f32 %v330, %v413
      %v415 = vpop.f32.mrb[0].mxu0
      %416 = vmatprep.mubr.f32.mxu0 0.0
      %417 = vmatmul.mubr.f32.gmra.mrb[0].mxu0 %v339
      %v418 = vpop.f32.mrb[0].mxu0
      %v419 = vadd.f32 %v331, %v418
      %v420 = vpop.f32.mrb[0].mxu0
      %421 = vmatprep.mubr.f32.mxu0 0.0
      %422 = vmatmul.mubr.f32.gmra.mrb[0].mxu0 %v342
      %v423 = vpop.f32.mrb[0].mxu0
      %v424 = vadd.f32 %v332, %v423
      %v425 = vpop.f32.mrb[0].mxu0
      %426 = vmatprep.mubr.f32.mxu0 0.0
      %427 = vmatmul.mubr.f32.gmra.mrb[0].mxu0 %v345
      %v428 = vpop.f32.mrb[0].mxu0
      %v429 = vadd.f32 %v333, %v428
      %v430 = vpop.f32.mrb[0].mxu0
      %431 = vdwg.mxu0
      %v432 = vsub.f32 0.0, %v414
      %v433 = vsub.f32 0.0, %v419
      %v434 = vsub.f32 0.0, %v424
      %v435 = vsub.f32 0.0, %v429
      %v436 = vmul.f32 %v432, 1.442695
      %v437 = vpow.pop %v436
      %v438 = vmul.f32 %v433, 1.442695
      %v439 = vpow.pop %v438
      %v440 = vmul.f32 %v434, 1.442695
      %v441 = vpow.pop %v440
      %v442 = vmul.f32 %v435, 1.442695
      %v443 = vpow.pop %v442
      %v444 = vadd.f32 %v437, 1.0
      %v445 = vadd.f32 %v439, 1.0
      %v446 = vadd.f32 %v441, 1.0
      %v447 = vadd.f32 %v443, 1.0
      %v448 = vrcp.pop %v444
      %v449 = vmul.f32 1.0, %v448
      %v450 = vrcp.pop %v445
      %v451 = vmul.f32 1.0, %v450
      %v452 = vrcp.pop %v446
      %v453 = vmul.f32 1.0, %v452
      %v454 = vrcp.pop %v447
      %v455 = vmul.f32 1.0, %v454
      %457 = vset.pattern.permute.xlu0 0
      %458 = vperm.xlu0 %457, %v449
      %v459 = vpop.permute.xlu0 %458
      %462 = vset.pattern.permute.xlu0 0
      %463 = vperm.xlu0 %462, %v451
      %v464 = vpop.permute.xlu0 %463
      %467 = vset.pattern.permute.xlu0 0
      %468 = vperm.xlu0 %467, %v453
      %v469 = vpop.permute.xlu0 %468
      %472 = vset.pattern.permute.xlu0 0
      %473 = vperm.xlu0 %472, %v455
      %v474 = vpop.permute.xlu0 %473
      %v476 = vmul.f32 %v225, %v459
      %v477 = vmul.f32 %v226, %v459
      %v478 = vmul.f32 %v227, %v464
      %v479 = vmul.f32 %v228, %v464
      %v480 = vmul.f32 %v229, %v469
      %v481 = vmul.f32 %v230, %v469
      %v482 = vmul.f32 %v231, %v474
      %v483 = vmul.f32 %v232, %v474
      %484 = vst [vmem:[%s224] sm:$0xff] %v476
      %485 = vst [vmem:[%s224 + $0x8] sm:$0xff] %v477
      %486 = vst [vmem:[%s224 + $0x10] sm:$0xff] %v478
      %487 = vst [vmem:[%s224 + $0x18] sm:$0xff] %v479
      %488 = vst [vmem:[%s224 + $0x20] sm:$0xff] %v480
      %489 = vst [vmem:[%s224 + $0x28] sm:$0xff] %v481
      %490 = vst [vmem:[%s224 + $0x30] sm:$0xff] %v482
      %491 = vst [vmem:[%s224 + $0x38] sm:$0xff] %v483
      %p492 = scmp.lt.s32.totalorder %s16, 1
      %s493 = scalar_select %p492, %s16, 1
      %s494 = smul.addr %s493, 8
      %s495 = smul.addr %s494, 8
      %s496 = scalar_lea.vmem %s5, %s495
      // Predicated region
      $region41: #{_se_forward.1} parent=39 // pred_check
        %p497 = pneg %p144
      $region42: #{_se_forward.1} parent=39 // pred_check_branch
        %499 = sbr.rel (%p497) target = $region44
      $region43: #{_se_forward.1} parent=39 // pred_region
        _
      $region44: #{_se_forward.1} parent=39 // pred_fallthru
        _
    $region40: #{_se_forward.1} parent=5 // pred_fallthru
      _
    %p500 = scmp.le.s32.totalorder 2, %s11
    // Predicated region
    $region45: #{_se_forward.1} parent=5 // pred_check
      %p501 = pneg %p500
    $region46: #{_se_forward.1} parent=5 // pred_check_branch
      %503 = sbr.rel (%p501) target = $region48
    $region47: #{_se_forward.1} parent=5 // pred_region
      %s504 = ssub.s32 %s11, 2
      // Predicated region
      $region49: #{_se_forward.1} parent=47 // pred_check
        %p505 = pneg %p150
      $region50: #{_se_forward.1} parent=47 // pred_check_branch
        %507 = sbr.rel (%p505) target = $region52
      $region51: #{_se_forward.1} parent=47 // pred_region
        %p508 = scmp.lt.s32.totalorder %s17, 1
        %s509 = scalar_select %p508, %s17, 1
        %s510 = smul.addr %s509, 8
        %s511 = smul.addr %s510, 8
        %s512 = scalar_lea.vmem %s5, %s511
      $region52: #{_se_forward.1} parent=47 // pred_fallthru
        _
    $region48: #{_se_forward.1} parent=5 // pred_fallthru
      _
  $region6: #{_se_forward.1} parent=0 // loop_footer
    %s15 = sadd.s32 1, %s11
  $region7: #{_se_forward.1} parent=0 // loop_footer_branch
    %10 = sbr.rel target = $region3
  $region8: #{_se_forward.1} parent=0 // loop_exit
    _

</llo_original>
